<compile_context>
chip_gen: v6e
topology: v6e:2x2x1
jax: 0.10.0
libtpu: 0.0.40
codegen_flags: <defaults>
</compile_context>

<pallas_src>
import jax
import jax.numpy as jnp
from jax.experimental import pallas as pl
from jax.experimental.pallas import tpu as pltpu


def primitive_head_kernel(x_ref, w1_ref, b1_ref, w2_ref, b2_ref,
                          w3_ref, b3_ref, net_ref, psum_ref):
    # x_ref: (Cin, TK) bf16 (batch dim squeezed out).
    x = x_ref[...]
    if x.dtype != jnp.bfloat16:          # static (trace-time) fallback
        x = x.astype(jnp.bfloat16)

    # conv1 (1x1, BN1 folded into weight/bias) + ReLU
    h = jnp.dot(w1_ref[...], x, preferred_element_type=jnp.float32)      # (128, TK)
    h = jnp.maximum(h + b1_ref[...], 0.0)

    # conv2 (1x1, BN2 folded into weight/bias) + ReLU
    h = jnp.dot(w2_ref[...], h.astype(jnp.bfloat16),
                preferred_element_type=jnp.float32)                      # (128, TK)
    h = jnp.maximum(h + b2_ref[...], 0.0)

    # conv3 (1x1) + bias, bf16 MXU inputs, f32 accumulation
    net = jnp.dot(w3_ref[...], h.astype(jnp.bfloat16),
                  preferred_element_type=jnp.float32)                    # (Cout, TK)
    net = net + b3_ref[...]

    # Unscaled output tile (SE gate is applied in the wrapper).
    net_ref[...] = net

    # Per-batch channel sum, accumulated across the K-tile axis (grid axis 1).
    @pl.when(pl.program_id(1) == 0)
    def _():
        psum_ref[...] = jnp.zeros_like(psum_ref)
    psum_ref[...] += jnp.sum(net, axis=1, keepdims=True)                 # (Cout, 1)


def primitive_module_forward(xyz, features, params, *, tile_k=256):
    """xyz: (B,K,3) f32 (aggregated_vote_xyz); features: (B,128,K) bf16/f32 (NCL)."""
    (w1, cb1, g1, be1, m1, v1,
     w2, cb2, g2, be2, m2, v2,
     w3, cb3, se1, se2) = params
    eps = 1e-5
    B, Cin, K = features.shape
    Cout = w3.shape[0]

    # The PyTorch module reshapes to (B,C,32,32) before SELayer; the global
    # avg-pool equals a mean over K only when K == 32*32.
    assert K == 1024, "PrimitiveModule requires num_proposal == 1024 (32*32 SE pool)"
    assert K % tile_k == 0 and tile_k % 128 == 0

    # Fold BN (inference / running-stats mode) into the conv weights & biases.
    s1 = g1 / jnp.sqrt(v1 + eps)
    s2 = g2 / jnp.sqrt(v2 + eps)
    w1f = (w1 * s1[:, None]).astype(jnp.bfloat16)            # (128, Cin)
    b1f = (be1 + (cb1 - m1) * s1)[:, None]                   # (128, 1)
    w2f = (w2 * s2[:, None]).astype(jnp.bfloat16)            # (128, 128)
    b2f = (be2 + (cb2 - m2) * s2)[:, None]                   # (128, 1)
    w3f = w3.astype(jnp.bfloat16)                            # (Cout, 128)
    b3f = cb3[:, None]                                       # (Cout, 1)

    full = lambda b, k: (0, 0)

    grid_spec = pltpu.PrefetchScalarGridSpec(
        num_scalar_prefetch=0,
        grid=(B, K // tile_k),
        in_specs=[
            # features, NCL, K-tiled (lane-dense, batch dim squeezed)
            pl.BlockSpec((pl.Squeezed(), Cin, tile_k), lambda b, k: (b, 0, k)),
            pl.BlockSpec((128, Cin), full),            # conv1 weight (BN1-folded, bf16)
            pl.BlockSpec((128, 1), full),              # conv1+bn1 folded bias
            pl.BlockSpec((128, 128), full),            # conv2 weight (BN2-folded, bf16)
            pl.BlockSpec((128, 1), full),              # conv2+bn2 folded bias
            pl.BlockSpec((Cout, 128), full),           # conv3 weight (bf16)
            pl.BlockSpec((Cout, 1), full),             # conv3 bias
        ],
        out_specs=[
            # unscaled net, lane-dense K tiles
            pl.BlockSpec((pl.Squeezed(), Cout, tile_k), lambda b, k: (b, 0, k)),
            # per-batch channel sum, resident across the K axis (accumulator)
            pl.BlockSpec((pl.Squeezed(), Cout, 1), lambda b, k: (b, 0, 0)),
        ],
    )

    cost = pl.CostEstimate(
        flops=2 * B * K * 128 * (Cin + 128 + Cout),
        transcendentals=0,
        bytes_accessed=(features.size * features.dtype.itemsize
                        + (w1f.size + w2f.size + w3f.size) * 2
                        + (b1f.size + b2f.size + b3f.size) * 4
                        + B * Cout * K * 4 + B * Cout * 4),
    )

    net, psum = pl.pallas_call(
        primitive_head_kernel,
        out_shape=(jax.ShapeDtypeStruct((B, Cout, K), jnp.float32),
                   jax.ShapeDtypeStruct((B, Cout, 1), jnp.float32)),
        grid_spec=grid_spec,
        compiler_params=pltpu.CompilerParams(
            dimension_semantics=("parallel", "arbitrary")),
        cost_estimate=cost,
    )(features, w1f, b1f, w2f, b2f, w3f, b3f)

    # SELayer gate (tiny: ~32 MACs per FC) + decode_scores left to XLA; they
    # fuse with the (B,Cout,K)->(B,K,Cout) transpose and the base_xyz add.
    y = psum[:, :, 0] * (1.0 / K)                            # (B, Cout) global mean
    y = jnp.maximum(y @ se1.T, 0.0)                          # (B, Cout//2)
    gate = jax.nn.sigmoid(y @ se2.T)                         # (B, Cout)
    net = net * gate[:, :, None]                             # (B, Cout, K)

    net_t = jnp.transpose(net, (0, 2, 1))                    # (B, K, Cout)
    center = xyz + net_t[:, :, 0:3]
    sem = net_t[:, :, 3:]

    end_points = {
        "aggregated_vote_xyz": xyz,
        "aggregated_feature": features,
        "center": center,
        "sem_cls_scores": sem,
    }
    return center, features, end_points


def reference_forward(xyz, features, params):
    """Pure-JAX f32 reference of the PyTorch forward (BN in inference mode)."""
    (w1, cb1, g1, be1, m1, v1,
     w2, cb2, g2, be2, m2, v2,
     w3, cb3, se1, se2) = params
    eps = 1e-5
    feat = features.astype(jnp.float32)

    def bn(h, g, be, m, v):
        return (g[None, :, None] * (h - m[None, :, None])
                / jnp.sqrt(v + eps)[None, :, None] + be[None, :, None])

    h = jnp.einsum('oc,bck->bok', w1, feat) + cb1[None, :, None]
    h = jnp.maximum(bn(h, g1, be1, m1, v1), 0.0)
    h = jnp.einsum('oc,bck->bok', w2, h) + cb2[None, :, None]
    h = jnp.maximum(bn(h, g2, be2, m2, v2), 0.0)
    net = jnp.einsum('oc,bck->bok', w3, h) + cb3[None, :, None]   # (B, Cout, K)

    y = jnp.mean(net, axis=2)                                     # avgpool over 32*32 == K
    y = jnp.maximum(y @ se1.T, 0.0)
    y = jax.nn.sigmoid(y @ se2.T)
    net = net * y[:, :, None]

    net_t = jnp.transpose(net, (0, 2, 1))                         # (B, K, Cout)
    center = xyz + net_t[:, :, 0:3]
    sem = net_t[:, :, 3:]
    return center, sem


def make_params(key, cin=128, num_class=4, numd=1):
    cout = 3 + numd + num_class
    hid = cout // 2
    ks = jax.random.split(key, 16)

    w1 = jax.random.normal(ks[0], (128, cin), jnp.float32) * 0.05     # Conv1d weight (out,in)
    cb1 = jax.random.normal(ks[1], (128,), jnp.float32) * 0.05
    w2 = jax.random.normal(ks[2], (128, 128), jnp.float32) * 0.05
    cb2 = jax.random.normal(ks[3], (128,), jnp.float32) * 0.05
    w3 = jax.random.normal(ks[4], (cout, 128), jnp.float32) * 0.05
    cb3 = jax.random.normal(ks[5], (cout,), jnp.float32) * 0.05

    def bn_stats(kg, kb, km, kv, c):
        gamma = 1.0 + 0.1 * jax.random.normal(kg, (c,), jnp.float32)
        beta = 0.1 * jax.random.normal(kb, (c,), jnp.float32)
        mean = 0.05 * jax.random.normal(km, (c,), jnp.float32)
        var = 1.0 + 0.1 * jax.random.uniform(kv, (c,), jnp.float32)
        return gamma, beta, mean, var

    g1, be1, m1, v1 = bn_stats(ks[6], ks[7], ks[8], ks[9], 128)
    g2, be2, m2, v2 = bn_stats(ks[10], ks[11], ks[12], ks[13], 128)

    se1 = jax.random.normal(ks[14], (hid, cout), jnp.float32) * 0.3    # Linear(cout, hid) weight
    se2 = jax.random.normal(ks[15], (cout, hid), jnp.float32) * 0.3    # Linear(hid, cout) weight

    return (w1, cb1, g1, be1, m1, v1,
            w2, cb2, g2, be2, m2, v2,
            w3, cb3, se1, se2)


if __name__ == "__main__":
    B = 2
    K = 1024          # num_proposal; the module reshapes to (B,C,32,32) so K must be 1024
    CIN = 128         # vote_aggregation output feature dim
    NUM_CLASS = 4
    NUMD = 1
    COUT = 3 + NUMD + NUM_CLASS

    key = jax.random.PRNGKey(0)
    k_xyz, k_feat, k_par = jax.random.split(key, 3)
    xyz = jax.random.normal(k_xyz, (B, K, 3), jnp.float32)
    # Upstream vote_aggregation producer emits bf16 NCL features (no standalone
    # f32->bf16 cast / extra HBM round trip in the wrapper).
    features = jax.random.normal(k_feat, (B, CIN, K), jnp.float32).astype(jnp.bfloat16)
    params = make_params(k_par, CIN, NUM_CLASS, NUMD)

    center, feats_out, end_points = primitive_module_forward(xyz, features, params)
    center = jax.block_until_ready(center)
    sem = jax.block_until_ready(end_points["sem_cls_scores"])

    ref_center, ref_sem = reference_forward(xyz, features, params)
    # conv1/conv2/conv3 run with bf16 MXU inputs (f32 accumulation) -> loose tolerance.
    assert jnp.allclose(center, ref_center, atol=1e-2, rtol=1e-2), "center mismatch"
    assert jnp.allclose(sem, ref_sem, atol=1e-2, rtol=1e-2), "sem_cls_scores mismatch"
    assert center.shape == (B, K, 3) and sem.shape == (B, K, COUT - 3)

    print("KERNEL_OK")
</pallas_src>

<mosaic_0001>
module attributes {stable_mosaic.version = 11 : i64} {
  func.func @primitive_head_kernel(%arg0: i32, %arg1: i32, %arg2: memref<1x128x256xbf16, #tpu.memory_space<vmem>>, %arg3: memref<128x128xbf16, #tpu.memory_space<vmem>>, %arg4: memref<128x1xf32, #tpu.memory_space<vmem>>, %arg5: memref<128x128xbf16, #tpu.memory_space<vmem>>, %arg6: memref<128x1xf32, #tpu.memory_space<vmem>>, %arg7: memref<8x128xbf16, #tpu.memory_space<vmem>>, %arg8: memref<8x1xf32, #tpu.memory_space<vmem>>, %arg9: memref<1x8x256xf32, #tpu.memory_space<vmem>>, %arg10: memref<1x8x1xf32, #tpu.memory_space<vmem>>) attributes {dimension_semantics = [#tpu.dimension_semantics<parallel>, #tpu.dimension_semantics<arbitrary>], iteration_bounds = array<i64: 2, 4>, scalar_prefetch = 0 : i64, scratch_operands = 0 : i64, tpu.core_type = #tpu.core_type<tc>, window_params = [{transform_indices = @transform_0, window_bounds = array<i64: 1, 128, 256>}, {pipeline_mode = #tpu.pipeline_mode<synchronous>, transform_indices = @transform_1, window_bounds = array<i64: 128, 128>}, {pipeline_mode = #tpu.pipeline_mode<synchronous>, transform_indices = @transform_2, window_bounds = array<i64: 128, 1>}, {pipeline_mode = #tpu.pipeline_mode<synchronous>, transform_indices = @transform_3, window_bounds = array<i64: 128, 128>}, {pipeline_mode = #tpu.pipeline_mode<synchronous>, transform_indices = @transform_4, window_bounds = array<i64: 128, 1>}, {pipeline_mode = #tpu.pipeline_mode<synchronous>, transform_indices = @transform_5, window_bounds = array<i64: 8, 128>}, {pipeline_mode = #tpu.pipeline_mode<synchronous>, transform_indices = @transform_6, window_bounds = array<i64: 8, 1>}, {transform_indices = @transform_7, window_bounds = array<i64: 1, 8, 256>}, {transform_indices = @transform_8, window_bounds = array<i64: 1, 8, 1>}]} {
    %c0 = arith.constant 0 : index
    %c0_0 = arith.constant 0 : index
    %c0_1 = arith.constant 0 : index
    %0 = vector.load %arg2[%c0, %c0_0, %c0_1] : memref<1x128x256xbf16, #tpu.memory_space<vmem>>, vector<1x128x256xbf16>
    %1 = vector.shape_cast %0 : vector<1x128x256xbf16> to vector<128x256xbf16>
    %c0_2 = arith.constant 0 : index
    %c0_3 = arith.constant 0 : index
    %2 = vector.load %arg3[%c0_2, %c0_3] : memref<128x128xbf16, #tpu.memory_space<vmem>>, vector<128x128xbf16>
    %cst = arith.constant dense<0.000000e+00> : vector<128x256xf32>
    %3 = tpu.matmul %2, %1, %cst {dimension_numbers = #tpu.dot_dimension_numbers<[1], [0], [0], [1], [0, 0, 1, 1], [], []>} : vector<128x128xbf16>, vector<128x256xbf16>, vector<128x256xf32> -> vector<128x256xf32>
    %c0_4 = arith.constant 0 : index
    %c0_5 = arith.constant 0 : index
    %4 = vector.load %arg4[%c0_4, %c0_5] : memref<128x1xf32, #tpu.memory_space<vmem>>, vector<128x1xf32>
    %5 = vector.broadcast %4 : vector<128x1xf32> to vector<128x256xf32>
    %6 = arith.addf %3, %5 : vector<128x256xf32>
    %cst_6 = arith.constant 0.000000e+00 : f32
    %7 = vector.broadcast %cst_6 : f32 to vector<128x256xf32>
    %8 = arith.maximumf %6, %7 : vector<128x256xf32>
    %c0_7 = arith.constant 0 : index
    %c0_8 = arith.constant 0 : index
    %9 = vector.load %arg5[%c0_7, %c0_8] : memref<128x128xbf16, #tpu.memory_space<vmem>>, vector<128x128xbf16>
    %10 = arith.truncf %8 : vector<128x256xf32> to vector<128x256xbf16>
    %cst_9 = arith.constant dense<0.000000e+00> : vector<128x256xf32>
    %11 = tpu.matmul %9, %10, %cst_9 {dimension_numbers = #tpu.dot_dimension_numbers<[1], [0], [0], [1], [0, 0, 1, 1], [], []>} : vector<128x128xbf16>, vector<128x256xbf16>, vector<128x256xf32> -> vector<128x256xf32>
    %c0_10 = arith.constant 0 : index
    %c0_11 = arith.constant 0 : index
    %12 = vector.load %arg6[%c0_10, %c0_11] : memref<128x1xf32, #tpu.memory_space<vmem>>, vector<128x1xf32>
    %13 = vector.broadcast %12 : vector<128x1xf32> to vector<128x256xf32>
    %14 = arith.addf %11, %13 : vector<128x256xf32>
    %cst_12 = arith.constant 0.000000e+00 : f32
    %15 = vector.broadcast %cst_12 : f32 to vector<128x256xf32>
    %16 = arith.maximumf %14, %15 : vector<128x256xf32>
    %c0_13 = arith.constant 0 : index
    %c0_14 = arith.constant 0 : index
    %17 = vector.load %arg7[%c0_13, %c0_14] : memref<8x128xbf16, #tpu.memory_space<vmem>>, vector<8x128xbf16>
    %18 = arith.truncf %16 : vector<128x256xf32> to vector<128x256xbf16>
    %cst_15 = arith.constant dense<0.000000e+00> : vector<8x256xf32>
    %19 = tpu.matmul %17, %18, %cst_15 {dimension_numbers = #tpu.dot_dimension_numbers<[1], [0], [0], [1], [0, 0, 1, 1], [], []>} : vector<8x128xbf16>, vector<128x256xbf16>, vector<8x256xf32> -> vector<8x256xf32>
    %c0_16 = arith.constant 0 : index
    %c0_17 = arith.constant 0 : index
    %20 = vector.load %arg8[%c0_16, %c0_17] : memref<8x1xf32, #tpu.memory_space<vmem>>, vector<8x1xf32>
    %21 = vector.broadcast %20 : vector<8x1xf32> to vector<8x256xf32>
    %22 = arith.addf %19, %21 : vector<8x256xf32>
    %c0_18 = arith.constant 0 : index
    %c0_19 = arith.constant 0 : index
    %c0_20 = arith.constant 0 : index
    %23 = vector.load %arg9[%c0_18, %c0_19, %c0_20] : memref<1x8x256xf32, #tpu.memory_space<vmem>>, vector<1x8x256xf32>
    %24 = vector.shape_cast %23 : vector<1x8x256xf32> to vector<8x256xf32>
    %25 = vector.shape_cast %22 : vector<8x256xf32> to vector<1x8x256xf32>
    tpu.vector_store %arg9[%c0_18, %c0_19, %c0_20], %25 {strides = array<i32>} : memref<1x8x256xf32, #tpu.memory_space<vmem>>, vector<1x8x256xf32>,
    %c0_i32 = arith.constant 0 : i32
    %26 = arith.cmpi eq, %arg1, %c0_i32 : i32
    %27 = arith.extui %26 : i1 to i32
    %c0_i32_21 = arith.constant 0 : i32
    %28 = arith.cmpi ne, %27, %c0_i32_21 : i32
    scf.if %28 {
      %cst_29 = arith.constant 0.000000e+00 : f32
      %37 = vector.broadcast %cst_29 : f32 to vector<8x1xf32>
      %c0_30 = arith.constant 0 : index
      %c0_31 = arith.constant 0 : index
      %c0_32 = arith.constant 0 : index
      %38 = vector.load %arg10[%c0_30, %c0_31, %c0_32] : memref<1x8x1xf32, #tpu.memory_space<vmem>>, vector<1x8x1xf32>
      %39 = vector.shape_cast %38 : vector<1x8x1xf32> to vector<8x1xf32>
      %40 = vector.shape_cast %37 : vector<8x1xf32> to vector<1x8x1xf32>
      tpu.vector_store %arg10[%c0_30, %c0_31, %c0_32], %40 {strides = array<i32>} : memref<1x8x1xf32, #tpu.memory_space<vmem>>, vector<1x8x1xf32>,
    } else {
    }
    %c0_22 = arith.constant 0 : index
    %c0_23 = arith.constant 0 : index
    %c0_24 = arith.constant 0 : index
    %29 = vector.load %arg10[%c0_22, %c0_23, %c0_24] : memref<1x8x1xf32, #tpu.memory_space<vmem>>, vector<1x8x1xf32>
    %30 = vector.shape_cast %29 : vector<1x8x1xf32> to vector<8x1xf32>
    %cst_25 = arith.constant dense<0.000000e+00> : vector<8xf32>
    %31 = vector.multi_reduction <add>, %22, %cst_25 [1] : vector<8x256xf32> to vector<8xf32>
    %32 = vector.shape_cast %31 : vector<8xf32> to vector<8x1xf32>
    %33 = arith.addf %30, %32 : vector<8x1xf32>
    %c0_26 = arith.constant 0 : index
    %c0_27 = arith.constant 0 : index
    %c0_28 = arith.constant 0 : index
    %34 = vector.load %arg10[%c0_26, %c0_27, %c0_28] : memref<1x8x1xf32, #tpu.memory_space<vmem>>, vector<1x8x1xf32>
    %35 = vector.shape_cast %34 : vector<1x8x1xf32> to vector<8x1xf32>
    %36 = vector.shape_cast %33 : vector<8x1xf32> to vector<1x8x1xf32>
    tpu.vector_store %arg10[%c0_26, %c0_27, %c0_28], %36 {strides = array<i32>} : memref<1x8x1xf32, #tpu.memory_space<vmem>>, vector<1x8x1xf32>,
    return
  }
  func.func @transform_0(%arg0: i32, %arg1: i32) -> (i32, i32, i32) {
    %c0_i32 = arith.constant 0 : i32
    %c0_i32_0 = arith.constant 0 : i32
    return %arg0, %c0_i32, %arg1 : i32, i32, i32
  }
  func.func @transform_1(%arg0: i32, %arg1: i32) -> (i32, i32) {
    %c0_i32 = arith.constant 0 : i32
    %c0_i32_0 = arith.constant 0 : i32
    %c0_i32_1 = arith.constant 0 : i32
    return %c0_i32, %c0_i32_0 : i32, i32
  }
  func.func @transform_2(%arg0: i32, %arg1: i32) -> (i32, i32) {
    %c0_i32 = arith.constant 0 : i32
    %c0_i32_0 = arith.constant 0 : i32
    %c0_i32_1 = arith.constant 0 : i32
    return %c0_i32, %c0_i32_0 : i32, i32
  }
  func.func @transform_3(%arg0: i32, %arg1: i32) -> (i32, i32) {
    %c0_i32 = arith.constant 0 : i32
    %c0_i32_0 = arith.constant 0 : i32
    %c0_i32_1 = arith.constant 0 : i32
    return %c0_i32, %c0_i32_0 : i32, i32
  }
  func.func @transform_4(%arg0: i32, %arg1: i32) -> (i32, i32) {
    %c0_i32 = arith.constant 0 : i32
    %c0_i32_0 = arith.constant 0 : i32
    %c0_i32_1 = arith.constant 0 : i32
    return %c0_i32, %c0_i32_0 : i32, i32
  }
  func.func @transform_5(%arg0: i32, %arg1: i32) -> (i32, i32) {
    %c0_i32 = arith.constant 0 : i32
    %c0_i32_0 = arith.constant 0 : i32
    %c0_i32_1 = arith.constant 0 : i32
    return %c0_i32, %c0_i32_0 : i32, i32
  }
  func.func @transform_6(%arg0: i32, %arg1: i32) -> (i32, i32) {
    %c0_i32 = arith.constant 0 : i32
    %c0_i32_0 = arith.constant 0 : i32
    %c0_i32_1 = arith.constant 0 : i32
    return %c0_i32, %c0_i32_0 : i32, i32
  }
  func.func @transform_7(%arg0: i32, %arg1: i32) -> (i32, i32, i32) {
    %c0_i32 = arith.constant 0 : i32
    %c0_i32_0 = arith.constant 0 : i32
    return %arg0, %c0_i32, %arg1 : i32, i32, i32
  }
  func.func @transform_8(%arg0: i32, %arg1: i32) -> (i32, i32, i32) {
    %c0_i32 = arith.constant 0 : i32
    %c0_i32_0 = arith.constant 0 : i32
    %c0_i32_1 = arith.constant 0 : i32
    return %arg0, %c0_i32, %c0_i32_0 : i32, i32, i32
  }
}

</mosaic_0001>

<llo_original>
// kernel: tpu_custom_call.1
$region0: #{tpu_custom_call.1}
  #allocation0 [shape = 'u32[]', space=smem, size = 0x4, offset = 0x4, fixed_abs, tag = 'smem constant byte address 0x4 - core index']
  #allocation1 [shape = 'u32[144,128]{1,0:T(1,128)}', space=vmem, size = 0x12000, scoped, tag = 'internal scratch']
  %s0 = inlined_call_operand.hbm [shape: bf16[2,128,1024], index: 0, kind: input, shape index: {}]
  %s1 = inlined_call_operand.vmem [shape: bf16[128,128], index: 1, kind: input, shape index: {}]
  %s2 = inlined_call_operand.vmem [shape: f32[128,1], index: 2, kind: input, shape index: {}]
  %s3 = inlined_call_operand.vmem [shape: bf16[128,128], index: 3, kind: input, shape index: {}]
  %s4 = inlined_call_operand.vmem [shape: f32[128,1], index: 4, kind: input, shape index: {}]
  %s5 = inlined_call_operand.vmem [shape: bf16[8,128], index: 5, kind: input, shape index: {}]
  %s6 = inlined_call_operand.vmem [shape: f32[8,1], index: 6, kind: input, shape index: {}]
  %s7 = inlined_call_operand.hbm [shape: f32[2,8,1024], index: 7, kind: output, shape index: {0}]
  %s8 = inlined_call_operand.vmem [shape: f32[2,8,1], index: 8, kind: output, shape index: {1}]
  %9 = xla_tuple %s7, %s8
  %s10 = sld [smem:[#allocation0]]
  $region77: #{tpu_custom_call.1} parent=0
    _
  %s12 = ssub.s32 1, %s10
  %s13 = scalar_select 0, %s12, %s10
  $region1: #{tpu_custom_call.1} parent=0
    #allocation2 [shape = 'u8[131072]{0}', space=vmem, size = 0x20000, scoped, tag = 'input window, operand 0']
    #allocation3 [shape = 's32[2]{0}', space=sflag, size = 0x8, scoped, tag = 'scoped memory for tpu_custom_call.1']
    #allocation4 [shape = 's32[2]{0}', space=sflag, size = 0x8, scoped, tag = 'scoped memory for tpu_custom_call.1']
    #allocation5 [shape = 'u8[16384]{0}', space=vmem, size = 0x4000, scoped, tag = 'output window, operand 0']
    %14 = vsyncpa [#allocation3], 0
    %s15 = scalar_lea.sflag [#allocation3], 1
    %16 = vsyncpa %s15, 0
    %17 = vsyncpa [#allocation4], 0
    %s18 = scalar_lea.sflag [#allocation4], 1
    %19 = vsyncpa %s18, 0
    loop: start=0, step=1, limit=10
    $region2: #{tpu_custom_call.1} parent=1 // loop_pre_header
      _
    $region3: #{tpu_custom_call.1} parent=1 // loop_header
      %s21 = sphi 0, %s25
      %p22 = scmp.ge.s32.totalorder %s21, 10
      %s28 = sphi 0, %s40
      %s29 = sphi 0, %s36
      %s30 = sphi 0, %s28
      %s31 = sphi 0, %s29
      %s32 = sphi 0, %s30
      %s33 = sphi 0, %s31
      %s45 = sphi 0, %s47
      %s48 = sphi 0, %s45
      %s49 = sphi 0, %s48
      %s65 = sphi 0, %s49
      %s69 = sphi 0, %s69
      %s71 = sphi 0, %s69
      %s72 = sphi 0, %s71
      %s86 = sphi 0, %s72
      %s90 = sphi 0, %s90
      %s92 = sphi 0, %s90
      %s93 = sphi 0, %s92
      %s107 = sphi 0, %s93
      %s111 = sphi 0, %s111
      %s113 = sphi 0, %s111
      %s114 = sphi 0, %s113
      %s128 = sphi 0, %s114
      %s132 = sphi 0, %s132
      %s134 = sphi 0, %s132
      %s135 = sphi 0, %s134
      %s149 = sphi 0, %s135
      %s153 = sphi 0, %s153
      %s155 = sphi 0, %s153
      %s156 = sphi 0, %s155
      %s170 = sphi 0, %s156
      %s174 = sphi 0, %s174
      %s176 = sphi 0, %s174
      %s177 = sphi 0, %s176
      %s191 = sphi 0, %s177
      %s199 = sphi 0, %s201
      %s202 = sphi 0, %s199
      %s203 = sphi 0, %s202
      %s219 = sphi 0, %s203
      %s225 = sphi 0, %s227
      %s228 = sphi 0, %s225
      %s229 = sphi 0, %s228
      %s245 = sphi 0, %s229
    $region4: #{tpu_custom_call.1} parent=1 // loop_header_branch
      %24 = sbr.rel (%p22) target = $region8
    $region5: #{tpu_custom_call.1} parent=1 // loop_body
      %s26 = ssub.s32 %s21, 1
      %s27 = ssub.s32 %s21, 2
      %s34 = sadd.s32 1, %s29
      %p35 = scmp.ge.s32.totalorder %s34, 4
      %s36 = scalar_select %p35, 0, %s34
      %s37 = sadd.s32 1, %s28
      %s38 = scalar_select %p35, %s37, %s28
      %p39 = scmp.ge.s32.totalorder %s38, 2
      %s40 = scalar_select %p39, 0, %s38
      %s41 = ssub.s32 %s28, %s40
      %s42 = ssub.s32 %s29, %s36
      %s43 = sor.u32 %s41, %s42
      %p44 = scmp.eq.s32.totalorder %s43, 0
      %s46 = sadd.s32 %s45, 1
      %s47 = scalar_select %p44, %s45, %s46
      %p50 = pneg %p44
      %p51 = scmp.eq.s32.totalorder %s21, 7
      %p52 = por %p50, %p51
      %p53 = scmp.ne.s32.totalorder %s45, %s48
      %p54 = scmp.eq.s32.totalorder %s21, 0
      %p55 = por %p53, %p54
      %p56 = scmp.ne.s32.totalorder %s45, %s48
      %p57 = scmp.eq.s32.totalorder %s26, 7
      %p58 = por %p56, %p57
      %p59 = scmp.ne.s32.totalorder %s48, %s49
      %p60 = scmp.eq.s32.totalorder %s26, 0
      %p61 = por %p59, %p60
      %p62 = scmp.ne.s32.totalorder %s48, %s49
      %p63 = scmp.eq.s32.totalorder %s27, 7
      %p64 = por %p62, %p63
      %p66 = scmp.ne.s32.totalorder %s49, %s65
      %p67 = scmp.eq.s32.totalorder %s27, 0
      %p68 = por %p66, %p67
      %s70 = sadd.s32 %s69, 1
      %p73 = scmp.eq.s32.totalorder %s21, 7
      %p74 = scmp.ne.s32.totalorder %s69, %s71
      %p75 = scmp.eq.s32.totalorder %s21, 0
      %p76 = por %p74, %p75
      %p77 = scmp.ne.s32.totalorder %s69, %s71
      %p78 = scmp.eq.s32.totalorder %s26, 7
      %p79 = por %p77, %p78
      %p80 = scmp.ne.s32.totalorder %s71, %s72
      %p81 = scmp.eq.s32.totalorder %s26, 0
      %p82 = por %p80, %p81
      %p83 = scmp.ne.s32.totalorder %s71, %s72
      %p84 = scmp.eq.s32.totalorder %s27, 7
      %p85 = por %p83, %p84
      %p87 = scmp.ne.s32.totalorder %s72, %s86
      %p88 = scmp.eq.s32.totalorder %s27, 0
      %p89 = por %p87, %p88
      %s91 = sadd.s32 %s90, 1
      %p94 = scmp.eq.s32.totalorder %s21, 7
      %p95 = scmp.ne.s32.totalorder %s90, %s92
      %p96 = scmp.eq.s32.totalorder %s21, 0
      %p97 = por %p95, %p96
      %p98 = scmp.ne.s32.totalorder %s90, %s92
      %p99 = scmp.eq.s32.totalorder %s26, 7
      %p100 = por %p98, %p99
      %p101 = scmp.ne.s32.totalorder %s92, %s93
      %p102 = scmp.eq.s32.totalorder %s26, 0
      %p103 = por %p101, %p102
      %p104 = scmp.ne.s32.totalorder %s92, %s93
      %p105 = scmp.eq.s32.totalorder %s27, 7
      %p106 = por %p104, %p105
      %p108 = scmp.ne.s32.totalorder %s93, %s107
      %p109 = scmp.eq.s32.totalorder %s27, 0
      %p110 = por %p108, %p109
      %s112 = sadd.s32 %s111, 1
      %p115 = scmp.eq.s32.totalorder %s21, 7
      %p116 = scmp.ne.s32.totalorder %s111, %s113
      %p117 = scmp.eq.s32.totalorder %s21, 0
      %p118 = por %p116, %p117
      %p119 = scmp.ne.s32.totalorder %s111, %s113
      %p120 = scmp.eq.s32.totalorder %s26, 7
      %p121 = por %p119, %p120
      %p122 = scmp.ne.s32.totalorder %s113, %s114
      %p123 = scmp.eq.s32.totalorder %s26, 0
      %p124 = por %p122, %p123
      %p125 = scmp.ne.s32.totalorder %s113, %s114
      %p126 = scmp.eq.s32.totalorder %s27, 7
      %p127 = por %p125, %p126
      %p129 = scmp.ne.s32.totalorder %s114, %s128
      %p130 = scmp.eq.s32.totalorder %s27, 0
      %p131 = por %p129, %p130
      %s133 = sadd.s32 %s132, 1
      %p136 = scmp.eq.s32.totalorder %s21, 7
      %p137 = scmp.ne.s32.totalorder %s132, %s134
      %p138 = scmp.eq.s32.totalorder %s21, 0
      %p139 = por %p137, %p138
      %p140 = scmp.ne.s32.totalorder %s132, %s134
      %p141 = scmp.eq.s32.totalorder %s26, 7
      %p142 = por %p140, %p141
      %p143 = scmp.ne.s32.totalorder %s134, %s135
      %p144 = scmp.eq.s32.totalorder %s26, 0
      %p145 = por %p143, %p144
      %p146 = scmp.ne.s32.totalorder %s134, %s135
      %p147 = scmp.eq.s32.totalorder %s27, 7
      %p148 = por %p146, %p147
      %p150 = scmp.ne.s32.totalorder %s135, %s149
      %p151 = scmp.eq.s32.totalorder %s27, 0
      %p152 = por %p150, %p151
      %s154 = sadd.s32 %s153, 1
      %p157 = scmp.eq.s32.totalorder %s21, 7
      %p158 = scmp.ne.s32.totalorder %s153, %s155
      %p159 = scmp.eq.s32.totalorder %s21, 0
      %p160 = por %p158, %p159
      %p161 = scmp.ne.s32.totalorder %s153, %s155
      %p162 = scmp.eq.s32.totalorder %s26, 7
      %p163 = por %p161, %p162
      %p164 = scmp.ne.s32.totalorder %s155, %s156
      %p165 = scmp.eq.s32.totalorder %s26, 0
      %p166 = por %p164, %p165
      %p167 = scmp.ne.s32.totalorder %s155, %s156
      %p168 = scmp.eq.s32.totalorder %s27, 7
      %p169 = por %p167, %p168
      %p171 = scmp.ne.s32.totalorder %s156, %s170
      %p172 = scmp.eq.s32.totalorder %s27, 0
      %p173 = por %p171, %p172
      %s175 = sadd.s32 %s174, 1
      %p178 = scmp.eq.s32.totalorder %s21, 7
      %p179 = scmp.ne.s32.totalorder %s174, %s176
      %p180 = scmp.eq.s32.totalorder %s21, 0
      %p181 = por %p179, %p180
      %p182 = scmp.ne.s32.totalorder %s174, %s176
      %p183 = scmp.eq.s32.totalorder %s26, 7
      %p184 = por %p182, %p183
      %p185 = scmp.ne.s32.totalorder %s176, %s177
      %p186 = scmp.eq.s32.totalorder %s26, 0
      %p187 = por %p185, %p186
      %p188 = scmp.ne.s32.totalorder %s176, %s177
      %p189 = scmp.eq.s32.totalorder %s27, 7
      %p190 = por %p188, %p189
      %p192 = scmp.ne.s32.totalorder %s177, %s191
      %p193 = scmp.eq.s32.totalorder %s27, 0
      %p194 = por %p192, %p193
      %s195 = ssub.s32 %s28, %s40
      %s196 = ssub.s32 %s29, %s36
      %s197 = sor.u32 %s195, %s196
      %p198 = scmp.eq.s32.totalorder %s197, 0
      %s200 = sadd.s32 %s199, 1
      %s201 = scalar_select %p198, %s199, %s200
      %p204 = pneg %p198
      %p205 = scmp.eq.s32.totalorder %s21, 7
      %p206 = por %p204, %p205
      %p207 = scmp.ne.s32.totalorder %s199, %s202
      %p208 = scmp.eq.s32.totalorder %s21, 0
      %p209 = por %p207, %p208
      %p210 = scmp.ne.s32.totalorder %s199, %s202
      %p211 = scmp.eq.s32.totalorder %s26, 7
      %p212 = por %p210, %p211
      %p213 = scmp.ne.s32.totalorder %s202, %s203
      %p214 = scmp.eq.s32.totalorder %s26, 0
      %p215 = por %p213, %p214
      %p216 = scmp.ne.s32.totalorder %s202, %s203
      %p217 = scmp.eq.s32.totalorder %s27, 7
      %p218 = por %p216, %p217
      %p220 = scmp.ne.s32.totalorder %s203, %s219
      %p221 = scmp.eq.s32.totalorder %s27, 0
      %p222 = por %p220, %p221
      %s223 = ssub.s32 %s28, %s40
      %p224 = scmp.eq.s32.totalorder %s223, 0
      %s226 = sadd.s32 %s225, 1
      %s227 = scalar_select %p224, %s225, %s226
      %p230 = pneg %p224
      %p231 = scmp.eq.s32.totalorder %s21, 7
      %p232 = por %p230, %p231
      %p233 = scmp.ne.s32.totalorder %s225, %s228
      %p234 = scmp.eq.s32.totalorder %s21, 0
      %p235 = por %p233, %p234
      %p236 = scmp.ne.s32.totalorder %s225, %s228
      %p237 = scmp.eq.s32.totalorder %s26, 7
      %p238 = por %p236, %p237
      %p239 = scmp.ne.s32.totalorder %s228, %s229
      %p240 = scmp.eq.s32.totalorder %s26, 0
      %p241 = por %p239, %p240
      %p242 = scmp.ne.s32.totalorder %s228, %s229
      %p243 = scmp.eq.s32.totalorder %s27, 7
      %p244 = por %p242, %p243
      %p246 = scmp.ne.s32.totalorder %s229, %s245
      %p247 = scmp.eq.s32.totalorder %s27, 0
      %p248 = por %p246, %p247
      %p249 = scmp.le.s32.totalorder 1, %s21
      %p250 = scmp.lt.s32.totalorder %s21, 9
      %p251 = pnand %p249, %p250
      %p252 = pneg %p251
      // Predicated region
      $region9: #{tpu_custom_call.1} parent=5 // pred_check
        _
      $region10: #{tpu_custom_call.1} parent=5 // pred_check_branch
        %254 = sbr.rel (%p251) target = $region12
      $region11: #{tpu_custom_call.1} parent=5 // pred_region
        %s255 = ssub.s32 %s21, 1
        // Predicated region
        $region13: #{tpu_custom_call.1} parent=11 // pred_check
          %p256 = pneg %p82
        $region14: #{tpu_custom_call.1} parent=11 // pred_check_branch
          %258 = sbr.rel (%p256) target = $region16
        $region15: #{tpu_custom_call.1} parent=11 // pred_region
          _
        $region16: #{tpu_custom_call.1} parent=11 // pred_fallthru
          _
        // Predicated region
        $region17: #{tpu_custom_call.1} parent=11 // pred_check
          %p259 = pneg %p103
        $region18: #{tpu_custom_call.1} parent=11 // pred_check_branch
          %261 = sbr.rel (%p259) target = $region20
        $region19: #{tpu_custom_call.1} parent=11 // pred_region
          _
        $region20: #{tpu_custom_call.1} parent=11 // pred_fallthru
          _
        // Predicated region
        $region21: #{tpu_custom_call.1} parent=11 // pred_check
          %p262 = pneg %p124
        $region22: #{tpu_custom_call.1} parent=11 // pred_check_branch
          %264 = sbr.rel (%p262) target = $region24
        $region23: #{tpu_custom_call.1} parent=11 // pred_region
          _
        $region24: #{tpu_custom_call.1} parent=11 // pred_fallthru
          _
        // Predicated region
        $region25: #{tpu_custom_call.1} parent=11 // pred_check
          %p265 = pneg %p145
        $region26: #{tpu_custom_call.1} parent=11 // pred_check_branch
          %267 = sbr.rel (%p265) target = $region28
        $region27: #{tpu_custom_call.1} parent=11 // pred_region
          _
        $region28: #{tpu_custom_call.1} parent=11 // pred_fallthru
          _
        // Predicated region
        $region29: #{tpu_custom_call.1} parent=11 // pred_check
          %p268 = pneg %p166
        $region30: #{tpu_custom_call.1} parent=11 // pred_check_branch
          %270 = sbr.rel (%p268) target = $region32
        $region31: #{tpu_custom_call.1} parent=11 // pred_region
          _
        $region32: #{tpu_custom_call.1} parent=11 // pred_fallthru
          _
        // Predicated region
        $region33: #{tpu_custom_call.1} parent=11 // pred_check
          %p271 = pneg %p187
        $region34: #{tpu_custom_call.1} parent=11 // pred_check_branch
          %273 = sbr.rel (%p271) target = $region36
        $region35: #{tpu_custom_call.1} parent=11 // pred_region
          _
        $region36: #{tpu_custom_call.1} parent=11 // pred_fallthru
          _
      $region12: #{tpu_custom_call.1} parent=5 // pred_fallthru
        _
      %p274 = scmp.lt.s32.totalorder %s21, 8
      // Predicated region
      $region37: #{tpu_custom_call.1} parent=5 // pred_check
        %p275 = pneg %p274
      $region38: #{tpu_custom_call.1} parent=5 // pred_check_branch
        %277 = sbr.rel (%p275) target = $region40
      $region39: #{tpu_custom_call.1} parent=5 // pred_region
        // Predicated region
        $region41: #{tpu_custom_call.1} parent=39 // pred_check
          %p278 = pneg %p55
        $region42: #{tpu_custom_call.1} parent=39 // pred_check_branch
          %280 = sbr.rel (%p278) target = $region44
        $region43: #{tpu_custom_call.1} parent=39 // pred_region
          %s281 = sand.u32 %s45, 1
          %s282 = scalar_lea.sflag [#allocation3], %s281
          %s283 = sand.u32 %s45, 1
          %s284 = smul.addr %s283, 128
          %s285 = scalar_lea.vmem [#allocation2], %s284
          %s286 = smul.u32 2, %s29
          %s288 = ssub.s32 2048, 2048
          %289 = vsyncadd %s282, %s288
          %s290 = smul.addr %s28, 128
          %s291 = sadd.s32 %s286, %s290
          %s292 = smul.addr %s291, 64
          %s293 = scalar_lea.hbm %s0, %s292
          %s294 = sshll.u32 %s285, 4
          %s295 = int_to_ptr.vmem [resolvable:$true] %s294
          %300 = dma.hbm_to_vmem [thread:$0]  %s293, 2048, %s295, %s282, 512, 128, 8
        $region44: #{tpu_custom_call.1} parent=39 // pred_fallthru
          _
      $region40: #{tpu_custom_call.1} parent=5 // pred_fallthru
        _
      %p301 = scmp.le.s32.totalorder 1, %s21
      %p302 = scmp.lt.s32.totalorder %s21, 9
      %p303 = pnand %p301, %p302
      %p304 = pneg %p303
      // Predicated region
      $region45: #{tpu_custom_call.1} parent=5 // pred_check
        _
      $region46: #{tpu_custom_call.1} parent=5 // pred_check_branch
        %306 = sbr.rel (%p303) target = $region48
      $region47: #{tpu_custom_call.1} parent=5 // pred_region
        %s307 = ssub.s32 %s21, 1
        %s308 = sand.u32 %s48, 1
        %s309 = scalar_lea.sflag [#allocation3], %s308
        %s310 = sand.u32 %s48, 1
        %s311 = smul.addr %s310, 128
        %s312 = scalar_lea.vmem [#allocation2], %s311
        // Predicated region
        $region49: #{tpu_custom_call.1} parent=47 // pred_check
          %p313 = pneg %p61
        $region50: #{tpu_custom_call.1} parent=47 // pred_check_branch
          %315 = sbr.rel (%p313) target = $region52
        $region51: #{tpu_custom_call.1} parent=47 // pred_region
          %316 = dma.done %s309, 2048
        $region52: #{tpu_custom_call.1} parent=47 // pred_fallthru
          _
        %s317 = sand.u32 %s48, 1
        %s318 = scalar_lea.sflag [#allocation3], %s317
        %s319 = sand.u32 %s48, 1
        %s320 = smul.addr %s319, 128
        %s321 = scalar_lea.vmem [#allocation2], %s320
        %p322 = pneg %p61
        %p323 = pneg %p58
        %p324 = pneg %p82
        %p325 = pneg %p79
        %p326 = pneg %p103
        %p327 = pneg %p100
        %p328 = pneg %p124
        %p329 = pneg %p121
        %p330 = pneg %p145
        %p331 = pneg %p142
        %p332 = pneg %p166
        %p333 = pneg %p163
        %p334 = pneg %p187
        %p335 = pneg %p184
        %p336 = pneg %p215
        %p337 = pneg %p212
        %s338 = sand.u32 %s202, 1
        %s339 = scalar_lea.sflag [#allocation4], %s338
        %s340 = sand.u32 %s202, 1
        %s341 = smul.addr %s340, 16
        %s342 = scalar_lea.vmem [#allocation5], %s341
        %p343 = pneg %p241
        %p344 = pneg %p238
        %p345 = scmp.lt.s32.totalorder %s30, 1
        %s346 = scalar_select %p345, %s30, 1
        %s347 = smul.addr %s346, 8
        %s348 = scalar_lea.vmem %s8, %s347
        %s349 = smul.u32 2, %s31
        %s350 = smul.u32 2, %s31
        %p351 = scmp.lt.s32.totalorder %s30, 1
        %s352 = scalar_select %p351, %s30, 1
        %s353 = smul.addr %s352, 8
        %s354 = scalar_lea.vmem %s8, %s353
        %v356 = vld [vmem:[%s312] sm:$0xff]
        %v357 = vld [vmem:[%s312 + $0x8] sm:$0xff]
        %v358 = vld [vmem:[%s312 + $0x10] sm:$0xff]
        %v359 = vld [vmem:[%s312 + $0x18] sm:$0xff]
        %v360 = vld [vmem:[%s312 + $0x20] sm:$0xff]
        %v361 = vld [vmem:[%s312 + $0x28] sm:$0xff]
        %v362 = vld [vmem:[%s312 + $0x30] sm:$0xff]
        %v363 = vld [vmem:[%s312 + $0x38] sm:$0xff]
        %v364 = vld [vmem:[%s312 + $0x40] sm:$0xff]
        %v365 = vld [vmem:[%s312 + $0x48] sm:$0xff]
        %v366 = vld [vmem:[%s312 + $0x50] sm:$0xff]
        %v367 = vld [vmem:[%s312 + $0x58] sm:$0xff]
        %v368 = vld [vmem:[%s312 + $0x60] sm:$0xff]
        %v369 = vld [vmem:[%s312 + $0x68] sm:$0xff]
        %v370 = vld [vmem:[%s312 + $0x70] sm:$0xff]
        %v371 = vld [vmem:[%s312 + $0x78] sm:$0xff]
        %v372 = vld [vmem:[%s1] sm:$0xf]
        %v373 = vld [vmem:[%s1 + $0x4] sm:$0xf]
        %v374 = vld [vmem:[%s1 + $0x8] sm:$0xf]
        %v375 = vld [vmem:[%s1 + $0xc] sm:$0xf]
        %v376 = vld [vmem:[%s1 + $0x10] sm:$0xf]
        %v377 = vld [vmem:[%s1 + $0x14] sm:$0xf]
        %v378 = vld [vmem:[%s1 + $0x18] sm:$0xf]
        %v379 = vld [vmem:[%s1 + $0x1c] sm:$0xf]
        %v380 = vld [vmem:[%s1 + $0x20] sm:$0xf]
        %v381 = vld [vmem:[%s1 + $0x24] sm:$0xf]
        %v382 = vld [vmem:[%s1 + $0x28] sm:$0xf]
        %v383 = vld [vmem:[%s1 + $0x2c] sm:$0xf]
        %v384 = vld [vmem:[%s1 + $0x30] sm:$0xf]
        %v385 = vld [vmem:[%s1 + $0x34] sm:$0xf]
        %v386 = vld [vmem:[%s1 + $0x38] sm:$0xf]
        %v387 = vld [vmem:[%s1 + $0x3c] sm:$0xf]
        %v388 = vld [vmem:[%s2] sm:$0xff]
        %v389 = vld [vmem:[%s2 + $0x8] sm:$0xff]
        %v390 = vld [vmem:[%s2 + $0x10] sm:$0xff]
        %v391 = vld [vmem:[%s2 + $0x18] sm:$0xff]
        %v392 = vld [vmem:[%s2 + $0x20] sm:$0xff]
        %v393 = vld [vmem:[%s2 + $0x28] sm:$0xff]
        %v394 = vld [vmem:[%s2 + $0x30] sm:$0xff]
        %v395 = vld [vmem:[%s2 + $0x38] sm:$0xff]
        %v396 = vld [vmem:[%s2 + $0x40] sm:$0xff]
        %v397 = vld [vmem:[%s2 + $0x48] sm:$0xff]
        %v398 = vld [vmem:[%s2 + $0x50] sm:$0xff]
        %v399 = vld [vmem:[%s2 + $0x58] sm:$0xff]
        %v400 = vld [vmem:[%s2 + $0x60] sm:$0xff]
        %v401 = vld [vmem:[%s2 + $0x68] sm:$0xff]
        %v402 = vld [vmem:[%s2 + $0x70] sm:$0xff]
        %v403 = vld [vmem:[%s2 + $0x78] sm:$0xff]
        %405 = vset.pattern.permute.xlu0 0
        %406 = vperm.xlu0 %405, %v388
        %v407 = vpop.permute.xlu0 %406
        %410 = vset.pattern.permute.xlu0 0
        %411 = vperm.xlu0 %410, %v389
        %v412 = vpop.permute.xlu0 %411
        %415 = vset.pattern.permute.xlu0 0
        %416 = vperm.xlu0 %415, %v390
        %v417 = vpop.permute.xlu0 %416
        %420 = vset.pattern.permute.xlu0 0
        %421 = vperm.xlu0 %420, %v391
        %v422 = vpop.permute.xlu0 %421
        %425 = vset.pattern.permute.xlu0 0
        %426 = vperm.xlu0 %425, %v392
        %v427 = vpop.permute.xlu0 %426
        %430 = vset.pattern.permute.xlu0 0
        %431 = vperm.xlu0 %430, %v393
        %v432 = vpop.permute.xlu0 %431
        %435 = vset.pattern.permute.xlu0 0
        %436 = vperm.xlu0 %435, %v394
        %v437 = vpop.permute.xlu0 %436
        %440 = vset.pattern.permute.xlu0 0
        %441 = vperm.xlu0 %440, %v395
        %v442 = vpop.permute.xlu0 %441
        %445 = vset.pattern.permute.xlu0 0
        %446 = vperm.xlu0 %445, %v396
        %v447 = vpop.permute.xlu0 %446
        %450 = vset.pattern.permute.xlu0 0
        %451 = vperm.xlu0 %450, %v397
        %v452 = vpop.permute.xlu0 %451
        %455 = vset.pattern.permute.xlu0 0
        %456 = vperm.xlu0 %455, %v398
        %v457 = vpop.permute.xlu0 %456
        %460 = vset.pattern.permute.xlu0 0
        %461 = vperm.xlu0 %460, %v399
        %v462 = vpop.permute.xlu0 %461
        %465 = vset.pattern.permute.xlu0 0
        %466 = vperm.xlu0 %465, %v400
        %v467 = vpop.permute.xlu0 %466
        %470 = vset.pattern.permute.xlu0 0
        %471 = vperm.xlu0 %470, %v401
        %v472 = vpop.permute.xlu0 %471
        %475 = vset.pattern.permute.xlu0 0
        %476 = vperm.xlu0 %475, %v402
        %v477 = vpop.permute.xlu0 %476
        %480 = vset.pattern.permute.xlu0 0
        %481 = vperm.xlu0 %480, %v403
        %v482 = vpop.permute.xlu0 %481
        %v500 = vunpack.c.l.b16 %v372
        %v501 = vunpack.c.l.b16 %v373
        %v502 = vunpack.c.l.b16 %v374
        %v503 = vunpack.c.l.b16 %v375
        %v504 = vunpack.c.l.b16 %v376
        %v505 = vunpack.c.l.b16 %v377
        %v506 = vunpack.c.l.b16 %v378
        %v507 = vunpack.c.l.b16 %v379
        %v508 = vunpack.c.l.b16 %v380
        %v509 = vunpack.c.l.b16 %v381
        %v510 = vunpack.c.l.b16 %v382
        %v511 = vunpack.c.l.b16 %v383
        %v512 = vunpack.c.l.b16 %v384
        %v513 = vunpack.c.l.b16 %v385
        %v514 = vunpack.c.l.b16 %v386
        %v515 = vunpack.c.l.b16 %v387
        %v516 = vpack.c.b16 %v501, %v500
        %v517 = vpack.c.b16 %v503, %v502
        %v518 = vpack.c.b16 %v505, %v504
        %v519 = vpack.c.b16 %v507, %v506
        %v520 = vpack.c.b16 %v509, %v508
        %v521 = vpack.c.b16 %v511, %v510
        %v522 = vpack.c.b16 %v513, %v512
        %v523 = vpack.c.b16 %v515, %v514
        %v548 = vunpack.c.l.b16 %v356
        %v549 = vunpack.c.h.b16 %v356
        %v550 = vunpack.c.l.b16 %v357
        %v551 = vunpack.c.h.b16 %v357
        %v552 = vunpack.c.l.b16 %v358
        %v553 = vunpack.c.h.b16 %v358
        %v554 = vunpack.c.l.b16 %v359
        %v555 = vunpack.c.h.b16 %v359
        %v556 = vunpack.c.l.b16 %v360
        %v557 = vunpack.c.h.b16 %v360
        %v558 = vunpack.c.l.b16 %v361
        %v559 = vunpack.c.h.b16 %v361
        %v560 = vunpack.c.l.b16 %v362
        %v561 = vunpack.c.h.b16 %v362
        %v562 = vunpack.c.l.b16 %v363
        %v563 = vunpack.c.h.b16 %v363
        %v564 = vunpack.c.l.b16 %v364
        %v565 = vunpack.c.h.b16 %v364
        %v566 = vunpack.c.l.b16 %v365
        %v567 = vunpack.c.h.b16 %v365
        %v568 = vunpack.c.l.b16 %v366
        %v569 = vunpack.c.h.b16 %v366
        %v570 = vunpack.c.l.b16 %v367
        %v571 = vunpack.c.h.b16 %v367
        %v572 = vunpack.c.l.b16 %v368
        %v573 = vunpack.c.h.b16 %v368
        %v574 = vunpack.c.l.b16 %v369
        %v575 = vunpack.c.h.b16 %v369
        %v576 = vunpack.c.l.b16 %v370
        %v577 = vunpack.c.h.b16 %v370
        %v578 = vunpack.c.l.b16 %v371
        %v579 = vunpack.c.h.b16 %v371
        %v580 = vpack.c.b16 %v550, %v548
        %v581 = vpack.c.b16 %v551, %v549
        %v582 = vpack.c.b16 %v554, %v552
        %v583 = vpack.c.b16 %v555, %v553
        %v584 = vpack.c.b16 %v558, %v556
        %v585 = vpack.c.b16 %v559, %v557
        %v586 = vpack.c.b16 %v562, %v560
        %v587 = vpack.c.b16 %v563, %v561
        %v588 = vpack.c.b16 %v566, %v564
        %v589 = vpack.c.b16 %v567, %v565
        %v590 = vpack.c.b16 %v570, %v568
        %v591 = vpack.c.b16 %v571, %v569
        %v592 = vpack.c.b16 %v574, %v572
        %v593 = vpack.c.b16 %v575, %v573
        %v594 = vpack.c.b16 %v578, %v576
        %v595 = vpack.c.b16 %v579, %v577
        %612 = vmatprep.subr.bf16.mxu0 %v595
        %613 = vmatpush1.bf16.msra.mxu0 %v594
        %614 = vmatprep.subr.bf16.mxu0 %v593
        %615 = vmatpush1.bf16.msra.mxu0 %v592
        %616 = vmatprep.subr.bf16.mxu0 %v591
        %617 = vmatpush1.bf16.msra.mxu0 %v590
        %618 = vmatprep.subr.bf16.mxu0 %v589
        %619 = vmatpush1.bf16.msra.mxu0 %v588
        %620 = vmatprep.subr.bf16.mxu0 %v587
        %621 = vmatpush1.bf16.msra.mxu0 %v586
        %622 = vmatprep.subr.bf16.mxu0 %v585
        %623 = vmatpush1.bf16.msra.mxu0 %v584
        %624 = vmatprep.subr.bf16.mxu0 %v583
        %625 = vmatpush1.bf16.msra.mxu0 %v582
        %626 = vmatprep.subr.bf16.mxu0 %v581
        %627 = vmatpush1.bf16.msra.mxu0 %v580
        %628 = vmatprep.subr.bf16.mxu0 0
        %629 = vmatpush2.bf16.msra.mxu0 0
        %630 = vmatprep.subr.bf16.mxu0 0
        %631 = vmatpush2.bf16.msra.mxu0 0
        %632 = vmatprep.subr.bf16.mxu0 0
        %633 = vmatpush2.bf16.msra.mxu0 0
        %634 = vmatprep.subr.bf16.mxu0 0
        %635 = vmatpush2.bf16.msra.mxu0 0
        %636 = vmatprep.subr.bf16.mxu0 0
        %637 = vmatpush2.bf16.msra.mxu0 0
        %638 = vmatprep.subr.bf16.mxu0 0
        %639 = vmatpush2.bf16.msra.mxu0 0
        %640 = vmatprep.subr.bf16.mxu0 0
        %641 = vmatpush2.bf16.msra.mxu0 0
        %642 = vmatprep.subr.bf16.mxu0 0
        %643 = vmatpush2.bf16.msra.mxu0 0
        %644 = vmatprep.mubr.bf16.mxu0 0
        %645 = vmatmul.mubr.bf16.gmra.mxu0 %v516
        %v646 = vpop.f32.mrf.mxu0
        %v647 = vadd.f32 %v407, %v646
        %v648 = vpop.f32.mrf.mxu0
        %v649 = vadd.f32 %v407, %v648
        %v650 = vpop.f32.mrf.mxu0
        %v651 = vadd.f32 %v412, %v650
        %v652 = vpop.f32.mrf.mxu0
        %v653 = vadd.f32 %v412, %v652
        %654 = vmatprep.mubr.bf16.mxu0 0
        %655 = vmatmul.mubr.bf16.gmra.mxu0 %v517
        %v656 = vpop.f32.mrf.mxu0
        %v657 = vadd.f32 %v417, %v656
        %v658 = vpop.f32.mrf.mxu0
        %v659 = vadd.f32 %v417, %v658
        %v660 = vpop.f32.mrf.mxu0
        %v661 = vadd.f32 %v422, %v660
        %v662 = vpop.f32.mrf.mxu0
        %v663 = vadd.f32 %v422, %v662
        %664 = vmatprep.mubr.bf16.mxu0 0
        %665 = vmatmul.mubr.bf16.gmra.mxu0 %v518
        %v666 = vpop.f32.mrf.mxu0
        %v667 = vadd.f32 %v427, %v666
        %v668 = vpop.f32.mrf.mxu0
        %v669 = vadd.f32 %v427, %v668
        %v670 = vpop.f32.mrf.mxu0
        %v671 = vadd.f32 %v432, %v670
        %v672 = vpop.f32.mrf.mxu0
        %v673 = vadd.f32 %v432, %v672
        %674 = vmatprep.mubr.bf16.mxu0 0
        %675 = vmatmul.mubr.bf16.gmra.mxu0 %v519
        %v676 = vpop.f32.mrf.mxu0
        %v677 = vadd.f32 %v437, %v676
        %v678 = vpop.f32.mrf.mxu0
        %v679 = vadd.f32 %v437, %v678
        %v680 = vpop.f32.mrf.mxu0
        %v681 = vadd.f32 %v442, %v680
        %v682 = vpop.f32.mrf.mxu0
        %v683 = vadd.f32 %v442, %v682
        %684 = vmatprep.mubr.bf16.mxu0 0
        %685 = vmatmul.mubr.bf16.gmra.mxu0 %v520
        %v686 = vpop.f32.mrf.mxu0
        %v687 = vadd.f32 %v447, %v686
        %v688 = vpop.f32.mrf.mxu0
        %v689 = vadd.f32 %v447, %v688
        %v690 = vpop.f32.mrf.mxu0
        %v691 = vadd.f32 %v452, %v690
        %v692 = vpop.f32.mrf.mxu0
        %v693 = vadd.f32 %v452, %v692
        %694 = vmatprep.mubr.bf16.mxu0 0
        %695 = vmatmul.mubr.bf16.gmra.mxu0 %v521
        %v696 = vpop.f32.mrf.mxu0
        %v697 = vadd.f32 %v457, %v696
        %v698 = vpop.f32.mrf.mxu0
        %v699 = vadd.f32 %v457, %v698
        %v700 = vpop.f32.mrf.mxu0
        %v701 = vadd.f32 %v462, %v700
        %v702 = vpop.f32.mrf.mxu0
        %v703 = vadd.f32 %v462, %v702
        %704 = vmatprep.mubr.bf16.mxu0 0
        %705 = vmatmul.mubr.bf16.gmra.mxu0 %v522
        %v706 = vpop.f32.mrf.mxu0
        %v707 = vadd.f32 %v467, %v706
        %v708 = vpop.f32.mrf.mxu0
        %v709 = vadd.f32 %v467, %v708
        %v710 = vpop.f32.mrf.mxu0
        %v711 = vadd.f32 %v472, %v710
        %v712 = vpop.f32.mrf.mxu0
        %v713 = vadd.f32 %v472, %v712
        %714 = vmatprep.mubr.bf16.mxu0 0
        %715 = vmatmul.mubr.bf16.gmra.mxu0 %v523
        %v716 = vpop.f32.mrf.mxu0
        %v717 = vadd.f32 %v477, %v716
        %v718 = vpop.f32.mrf.mxu0
        %v719 = vadd.f32 %v477, %v718
        %v720 = vpop.f32.mrf.mxu0
        %v721 = vadd.f32 %v482, %v720
        %v722 = vpop.f32.mrf.mxu0
        %v723 = vadd.f32 %v482, %v722
        %724 = vdwg.mxu0
        %v725 = vmax.f32 %v647, 0.0
        %v726 = vmax.f32 %v649, 0.0
        %v727 = vmax.f32 %v651, 0.0
        %v728 = vmax.f32 %v653, 0.0
        %v729 = vmax.f32 %v657, 0.0
        %v730 = vmax.f32 %v659, 0.0
        %v731 = vmax.f32 %v661, 0.0
        %v732 = vmax.f32 %v663, 0.0
        %v733 = vmax.f32 %v667, 0.0
        %v734 = vmax.f32 %v669, 0.0
        %v735 = vmax.f32 %v671, 0.0
        %v736 = vmax.f32 %v673, 0.0
        %v737 = vmax.f32 %v677, 0.0
        %v738 = vmax.f32 %v679, 0.0
        %v739 = vmax.f32 %v681, 0.0
        %v740 = vmax.f32 %v683, 0.0
        %v741 = vmax.f32 %v687, 0.0
        %v742 = vmax.f32 %v689, 0.0
        %v743 = vmax.f32 %v691, 0.0
        %v744 = vmax.f32 %v693, 0.0
        %v745 = vmax.f32 %v697, 0.0
        %v746 = vmax.f32 %v699, 0.0
        %v747 = vmax.f32 %v701, 0.0
        %v748 = vmax.f32 %v703, 0.0
        %v749 = vmax.f32 %v707, 0.0
        %v750 = vmax.f32 %v709, 0.0
        %v751 = vmax.f32 %v711, 0.0
        %v752 = vmax.f32 %v713, 0.0
        %v753 = vmax.f32 %v717, 0.0
        %v754 = vmax.f32 %v719, 0.0
        %v755 = vmax.f32 %v721, 0.0
        %v756 = vmax.f32 %v723, 0.0
        %v757 = vld [vmem:[%s3] sm:$0xf]
        %v758 = vld [vmem:[%s3 + $0x4] sm:$0xf]
        %v759 = vld [vmem:[%s3 + $0x8] sm:$0xf]
        %v760 = vld [vmem:[%s3 + $0xc] sm:$0xf]
        %v761 = vld [vmem:[%s3 + $0x10] sm:$0xf]
        %v762 = vld [vmem:[%s3 + $0x14] sm:$0xf]
        %v763 = vld [vmem:[%s3 + $0x18] sm:$0xf]
        %v764 = vld [vmem:[%s3 + $0x1c] sm:$0xf]
        %v765 = vld [vmem:[%s3 + $0x20] sm:$0xf]
        %v766 = vld [vmem:[%s3 + $0x24] sm:$0xf]
        %v767 = vld [vmem:[%s3 + $0x28] sm:$0xf]
        %v768 = vld [vmem:[%s3 + $0x2c] sm:$0xf]
        %v769 = vld [vmem:[%s3 + $0x30] sm:$0xf]
        %v770 = vld [vmem:[%s3 + $0x34] sm:$0xf]
        %v771 = vld [vmem:[%s3 + $0x38] sm:$0xf]
        %v772 = vld [vmem:[%s3 + $0x3c] sm:$0xf]
        %v773 = vpack.c.bf16 %v727, %v725
        %v774 = vpack.c.bf16 %v728, %v726
        %v775 = vpack.c.bf16 %v731, %v729
        %v776 = vpack.c.bf16 %v732, %v730
        %v777 = vpack.c.bf16 %v735, %v733
        %v778 = vpack.c.bf16 %v736, %v734
        %v779 = vpack.c.bf16 %v739, %v737
        %v780 = vpack.c.bf16 %v740, %v738
        %v781 = vpack.c.bf16 %v743, %v741
        %v782 = vpack.c.bf16 %v744, %v742
        %v783 = vpack.c.bf16 %v747, %v745
        %v784 = vpack.c.bf16 %v748, %v746
        %v785 = vpack.c.bf16 %v751, %v749
        %v786 = vpack.c.bf16 %v752, %v750
        %v787 = vpack.c.bf16 %v755, %v753
        %v788 = vpack.c.bf16 %v756, %v754
        %v789 = vld [vmem:[%s4] sm:$0xff]
        %v790 = vld [vmem:[%s4 + $0x8] sm:$0xff]
        %v791 = vld [vmem:[%s4 + $0x10] sm:$0xff]
        %v792 = vld [vmem:[%s4 + $0x18] sm:$0xff]
        %v793 = vld [vmem:[%s4 + $0x20] sm:$0xff]
        %v794 = vld [vmem:[%s4 + $0x28] sm:$0xff]
        %v795 = vld [vmem:[%s4 + $0x30] sm:$0xff]
        %v796 = vld [vmem:[%s4 + $0x38] sm:$0xff]
        %v797 = vld [vmem:[%s4 + $0x40] sm:$0xff]
        %v798 = vld [vmem:[%s4 + $0x48] sm:$0xff]
        %v799 = vld [vmem:[%s4 + $0x50] sm:$0xff]
        %v800 = vld [vmem:[%s4 + $0x58] sm:$0xff]
        %v801 = vld [vmem:[%s4 + $0x60] sm:$0xff]
        %v802 = vld [vmem:[%s4 + $0x68] sm:$0xff]
        %v803 = vld [vmem:[%s4 + $0x70] sm:$0xff]
        %v804 = vld [vmem:[%s4 + $0x78] sm:$0xff]
        %806 = vset.pattern.permute.xlu0 0
        %807 = vperm.xlu0 %806, %v789
        %v808 = vpop.permute.xlu0 %807
        %811 = vset.pattern.permute.xlu0 0
        %812 = vperm.xlu0 %811, %v790
        %v813 = vpop.permute.xlu0 %812
        %816 = vset.pattern.permute.xlu0 0
        %817 = vperm.xlu0 %816, %v791
        %v818 = vpop.permute.xlu0 %817
        %821 = vset.pattern.permute.xlu0 0
        %822 = vperm.xlu0 %821, %v792
        %v823 = vpop.permute.xlu0 %822
        %826 = vset.pattern.permute.xlu0 0
        %827 = vperm.xlu0 %826, %v793
        %v828 = vpop.permute.xlu0 %827
        %831 = vset.pattern.permute.xlu0 0
        %832 = vperm.xlu0 %831, %v794
        %v833 = vpop.permute.xlu0 %832
        %836 = vset.pattern.permute.xlu0 0
        %837 = vperm.xlu0 %836, %v795
        %v838 = vpop.permute.xlu0 %837
        %841 = vset.pattern.permute.xlu0 0
        %842 = vperm.xlu0 %841, %v796
        %v843 = vpop.permute.xlu0 %842
        %846 = vset.pattern.permute.xlu0 0
        %847 = vperm.xlu0 %846, %v797
        %v848 = vpop.permute.xlu0 %847
        %851 = vset.pattern.permute.xlu0 0
        %852 = vperm.xlu0 %851, %v798
        %v853 = vpop.permute.xlu0 %852
        %856 = vset.pattern.permute.xlu0 0
        %857 = vperm.xlu0 %856, %v799
        %v858 = vpop.permute.xlu0 %857
        %861 = vset.pattern.permute.xlu0 0
        %862 = vperm.xlu0 %861, %v800
        %v863 = vpop.permute.xlu0 %862
        %866 = vset.pattern.permute.xlu0 0
        %867 = vperm.xlu0 %866, %v801
        %v868 = vpop.permute.xlu0 %867
        %871 = vset.pattern.permute.xlu0 0
        %872 = vperm.xlu0 %871, %v802
        %v873 = vpop.permute.xlu0 %872
        %876 = vset.pattern.permute.xlu0 0
        %877 = vperm.xlu0 %876, %v803
        %v878 = vpop.permute.xlu0 %877
        %881 = vset.pattern.permute.xlu0 0
        %882 = vperm.xlu0 %881, %v804
        %v883 = vpop.permute.xlu0 %882
        %v901 = vunpack.c.l.b16 %v757
        %v902 = vunpack.c.l.b16 %v758
        %v903 = vunpack.c.l.b16 %v759
        %v904 = vunpack.c.l.b16 %v760
        %v905 = vunpack.c.l.b16 %v761
        %v906 = vunpack.c.l.b16 %v762
        %v907 = vunpack.c.l.b16 %v763
        %v908 = vunpack.c.l.b16 %v764
        %v909 = vunpack.c.l.b16 %v765
        %v910 = vunpack.c.l.b16 %v766
        %v911 = vunpack.c.l.b16 %v767
        %v912 = vunpack.c.l.b16 %v768
        %v913 = vunpack.c.l.b16 %v769
        %v914 = vunpack.c.l.b16 %v770
        %v915 = vunpack.c.l.b16 %v771
        %v916 = vunpack.c.l.b16 %v772
        %v917 = vpack.c.b16 %v902, %v901
        %v918 = vpack.c.b16 %v904, %v903
        %v919 = vpack.c.b16 %v906, %v905
        %v920 = vpack.c.b16 %v908, %v907
        %v921 = vpack.c.b16 %v910, %v909
        %v922 = vpack.c.b16 %v912, %v911
        %v923 = vpack.c.b16 %v914, %v913
        %v924 = vpack.c.b16 %v916, %v915
        %933 = vmatprep.subr.bf16.mxu0 %v788
        %934 = vmatpush1.bf16.msra.mxu0 %v787
        %935 = vmatprep.subr.bf16.mxu0 %v786
        %936 = vmatpush1.bf16.msra.mxu0 %v785
        %937 = vmatprep.subr.bf16.mxu0 %v784
        %938 = vmatpush1.bf16.msra.mxu0 %v783
        %939 = vmatprep.subr.bf16.mxu0 %v782
        %940 = vmatpush1.bf16.msra.mxu0 %v781
        %941 = vmatprep.subr.bf16.mxu0 %v780
        %942 = vmatpush1.bf16.msra.mxu0 %v779
        %943 = vmatprep.subr.bf16.mxu0 %v778
        %944 = vmatpush1.bf16.msra.mxu0 %v777
        %945 = vmatprep.subr.bf16.mxu0 %v776
        %946 = vmatpush1.bf16.msra.mxu0 %v775
        %947 = vmatprep.subr.bf16.mxu0 %v774
        %948 = vmatpush1.bf16.msra.mxu0 %v773
        %949 = vmatprep.subr.bf16.mxu0 0
        %950 = vmatpush2.bf16.msra.mxu0 0
        %951 = vmatprep.subr.bf16.mxu0 0
        %952 = vmatpush2.bf16.msra.mxu0 0
        %953 = vmatprep.subr.bf16.mxu0 0
        %954 = vmatpush2.bf16.msra.mxu0 0
        %955 = vmatprep.subr.bf16.mxu0 0
        %956 = vmatpush2.bf16.msra.mxu0 0
        %957 = vmatprep.subr.bf16.mxu0 0
        %958 = vmatpush2.bf16.msra.mxu0 0
        %959 = vmatprep.subr.bf16.mxu0 0
        %960 = vmatpush2.bf16.msra.mxu0 0
        %961 = vmatprep.subr.bf16.mxu0 0
        %962 = vmatpush2.bf16.msra.mxu0 0
        %963 = vmatprep.subr.bf16.mxu0 0
        %964 = vmatpush2.bf16.msra.mxu0 0
        %965 = vmatprep.mubr.bf16.mxu0 0
        %966 = vmatmul.mubr.bf16.gmra.mxu0 %v917
        %v967 = vpop.f32.mrf.mxu0
        %v968 = vadd.f32 %v808, %v967
        %v969 = vpop.f32.mrf.mxu0
        %v970 = vadd.f32 %v808, %v969
        %v971 = vpop.f32.mrf.mxu0
        %v972 = vadd.f32 %v813, %v971
        %v973 = vpop.f32.mrf.mxu0
        %v974 = vadd.f32 %v813, %v973
        %975 = vmatprep.mubr.bf16.mxu0 0
        %976 = vmatmul.mubr.bf16.gmra.mxu0 %v918
        %v977 = vpop.f32.mrf.mxu0
        %v978 = vadd.f32 %v818, %v977
        %v979 = vpop.f32.mrf.mxu0
        %v980 = vadd.f32 %v818, %v979
        %v981 = vpop.f32.mrf.mxu0
        %v982 = vadd.f32 %v823, %v981
        %v983 = vpop.f32.mrf.mxu0
        %v984 = vadd.f32 %v823, %v983
        %985 = vmatprep.mubr.bf16.mxu0 0
        %986 = vmatmul.mubr.bf16.gmra.mxu0 %v919
        %v987 = vpop.f32.mrf.mxu0
        %v988 = vadd.f32 %v828, %v987
        %v989 = vpop.f32.mrf.mxu0
        %v990 = vadd.f32 %v828, %v989
        %v991 = vpop.f32.mrf.mxu0
        %v992 = vadd.f32 %v833, %v991
        %v993 = vpop.f32.mrf.mxu0
        %v994 = vadd.f32 %v833, %v993
        %995 = vmatprep.mubr.bf16.mxu0 0
        %996 = vmatmul.mubr.bf16.gmra.mxu0 %v920
        %v997 = vpop.f32.mrf.mxu0
        %v998 = vadd.f32 %v838, %v997
        %v999 = vpop.f32.mrf.mxu0
        %v1000 = vadd.f32 %v838, %v999
        %v1001 = vpop.f32.mrf.mxu0
        %v1002 = vadd.f32 %v843, %v1001
        %v1003 = vpop.f32.mrf.mxu0
        %v1004 = vadd.f32 %v843, %v1003
        %1005 = vmatprep.mubr.bf16.mxu0 0
        %1006 = vmatmul.mubr.bf16.gmra.mxu0 %v921
        %v1007 = vpop.f32.mrf.mxu0
        %v1008 = vadd.f32 %v848, %v1007
        %v1009 = vpop.f32.mrf.mxu0
        %v1010 = vadd.f32 %v848, %v1009
        %v1011 = vpop.f32.mrf.mxu0
        %v1012 = vadd.f32 %v853, %v1011
        %v1013 = vpop.f32.mrf.mxu0
        %v1014 = vadd.f32 %v853, %v1013
        %1015 = vmatprep.mubr.bf16.mxu0 0
        %1016 = vmatmul.mubr.bf16.gmra.mxu0 %v922
        %v1017 = vpop.f32.mrf.mxu0
        %v1018 = vadd.f32 %v858, %v1017
        %v1019 = vpop.f32.mrf.mxu0
        %v1020 = vadd.f32 %v858, %v1019
        %v1021 = vpop.f32.mrf.mxu0
        %v1022 = vadd.f32 %v863, %v1021
        %v1023 = vpop.f32.mrf.mxu0
        %v1024 = vadd.f32 %v863, %v1023
        %1025 = vmatprep.mubr.bf16.mxu0 0
        %1026 = vmatmul.mubr.bf16.gmra.mxu0 %v923
        %v1027 = vpop.f32.mrf.mxu0
        %v1028 = vadd.f32 %v868, %v1027
        %v1029 = vpop.f32.mrf.mxu0
        %v1030 = vadd.f32 %v868, %v1029
        %v1031 = vpop.f32.mrf.mxu0
        %v1032 = vadd.f32 %v873, %v1031
        %v1033 = vpop.f32.mrf.mxu0
        %v1034 = vadd.f32 %v873, %v1033
        %1035 = vmatprep.mubr.bf16.mxu0 0
        %1036 = vmatmul.mubr.bf16.gmra.mxu0 %v924
        %v1037 = vpop.f32.mrf.mxu0
        %v1038 = vadd.f32 %v878, %v1037
        %v1039 = vpop.f32.mrf.mxu0
        %v1040 = vadd.f32 %v878, %v1039
        %v1041 = vpop.f32.mrf.mxu0
        %v1042 = vadd.f32 %v883, %v1041
        %v1043 = vpop.f32.mrf.mxu0
        %v1044 = vadd.f32 %v883, %v1043
        %1045 = vdwg.mxu0
        %v1046 = vmax.f32 %v968, 0.0
        %v1047 = vmax.f32 %v970, 0.0
        %v1048 = vmax.f32 %v972, 0.0
        %v1049 = vmax.f32 %v974, 0.0
        %v1050 = vmax.f32 %v978, 0.0
        %v1051 = vmax.f32 %v980, 0.0
        %v1052 = vmax.f32 %v982, 0.0
        %v1053 = vmax.f32 %v984, 0.0
        %v1054 = vmax.f32 %v988, 0.0
        %v1055 = vmax.f32 %v990, 0.0
        %v1056 = vmax.f32 %v992, 0.0
        %v1057 = vmax.f32 %v994, 0.0
        %v1058 = vmax.f32 %v998, 0.0
        %v1059 = vmax.f32 %v1000, 0.0
        %v1060 = vmax.f32 %v1002, 0.0
        %v1061 = vmax.f32 %v1004, 0.0
        %v1062 = vmax.f32 %v1008, 0.0
        %v1063 = vmax.f32 %v1010, 0.0
        %v1064 = vmax.f32 %v1012, 0.0
        %v1065 = vmax.f32 %v1014, 0.0
        %v1066 = vmax.f32 %v1018, 0.0
        %v1067 = vmax.f32 %v1020, 0.0
        %v1068 = vmax.f32 %v1022, 0.0
        %v1069 = vmax.f32 %v1024, 0.0
        %v1070 = vmax.f32 %v1028, 0.0
        %v1071 = vmax.f32 %v1030, 0.0
        %v1072 = vmax.f32 %v1032, 0.0
        %v1073 = vmax.f32 %v1034, 0.0
        %v1074 = vmax.f32 %v1038, 0.0
        %v1075 = vmax.f32 %v1040, 0.0
        %v1076 = vmax.f32 %v1042, 0.0
        %v1077 = vmax.f32 %v1044, 0.0
        %v1078 = vld [vmem:[%s5] sm:$0xf]
        %v1079 = vpack.c.bf16 %v1048, %v1046
        %v1080 = vpack.c.bf16 %v1049, %v1047
        %v1081 = vpack.c.bf16 %v1052, %v1050
        %v1082 = vpack.c.bf16 %v1053, %v1051
        %v1083 = vpack.c.bf16 %v1056, %v1054
        %v1084 = vpack.c.bf16 %v1057, %v1055
        %v1085 = vpack.c.bf16 %v1060, %v1058
        %v1086 = vpack.c.bf16 %v1061, %v1059
        %v1087 = vpack.c.bf16 %v1064, %v1062
        %v1088 = vpack.c.bf16 %v1065, %v1063
        %v1089 = vpack.c.bf16 %v1068, %v1066
        %v1090 = vpack.c.bf16 %v1069, %v1067
        %v1091 = vpack.c.bf16 %v1072, %v1070
        %v1092 = vpack.c.bf16 %v1073, %v1071
        %v1093 = vpack.c.bf16 %v1076, %v1074
        %v1094 = vpack.c.bf16 %v1077, %v1075
        %v1095 = vld [vmem:[%s6] sm:$0xff]
        %1097 = vset.pattern.permute.xlu0 0
        %1098 = vperm.xlu0 %1097, %v1095
        %v1099 = vpop.permute.xlu0 %1098
        %1101 = vmatprep.subr.bf16.mxu0 %v1094
        %1102 = vmatpush1.bf16.msra.mxu0 %v1093
        %1103 = vmatprep.subr.bf16.mxu0 %v1092
        %1104 = vmatpush1.bf16.msra.mxu0 %v1091
        %1105 = vmatprep.subr.bf16.mxu0 %v1090
        %1106 = vmatpush1.bf16.msra.mxu0 %v1089
        %1107 = vmatprep.subr.bf16.mxu0 %v1088
        %1108 = vmatpush1.bf16.msra.mxu0 %v1087
        %1109 = vmatprep.subr.bf16.mxu0 %v1086
        %1110 = vmatpush1.bf16.msra.mxu0 %v1085
        %1111 = vmatprep.subr.bf16.mxu0 %v1084
        %1112 = vmatpush1.bf16.msra.mxu0 %v1083
        %1113 = vmatprep.subr.bf16.mxu0 %v1082
        %1114 = vmatpush1.bf16.msra.mxu0 %v1081
        %1115 = vmatprep.subr.bf16.mxu0 %v1080
        %1116 = vmatpush1.bf16.msra.mxu0 %v1079
        %1117 = vmatprep.subr.bf16.mxu0 0
        %1118 = vmatpush2.bf16.msra.mxu0 0
        %1119 = vmatprep.subr.bf16.mxu0 0
        %1120 = vmatpush2.bf16.msra.mxu0 0
        %1121 = vmatprep.subr.bf16.mxu0 0
        %1122 = vmatpush2.bf16.msra.mxu0 0
        %1123 = vmatprep.subr.bf16.mxu0 0
        %1124 = vmatpush2.bf16.msra.mxu0 0
        %1125 = vmatprep.subr.bf16.mxu0 0
        %1126 = vmatpush2.bf16.msra.mxu0 0
        %1127 = vmatprep.subr.bf16.mxu0 0
        %1128 = vmatpush2.bf16.msra.mxu0 0
        %1129 = vmatprep.subr.bf16.mxu0 0
        %1130 = vmatpush2.bf16.msra.mxu0 0
        %1131 = vmatprep.subr.bf16.mxu0 0
        %1132 = vmatpush2.bf16.msra.mxu0 0
        %1133 = vmatprep.mubr.bf16.mxu0 0
        %1134 = vmatmul.mubr.bf16.gmra.mxu0 %v1078
        %v1135 = vpop.f32.mrf.mxu0
        %v1136 = vadd.f32 %v1099, %v1135
        %v1137 = vpop.f32.mrf.mxu0
        %v1138 = vadd.f32 %v1099, %v1137
        %v1139 = vpop.f32.mrf.mxu0
        %v1140 = vpop.f32.mrf.mxu0
        %1141 = vdwg.mxu0
        %1142 = vst [vmem:[%s342] sm:$0xff] %v1136
        %1143 = vst [vmem:[%s342 + $0x8] sm:$0xff] %v1138
        %p1144 = scmp.eq.s32.totalorder %s31, 0
        // Predicated region
        $region53: #{tpu_custom_call.1} parent=47 // pred_check
          %p1145 = pneg %p1144
        $region54: #{tpu_custom_call.1} parent=47 // pred_check_branch
          %1147 = sbr.rel (%p1145) target = $region56
        $region55: #{tpu_custom_call.1} parent=47 // pred_region
          %vm1148 = vcmask 7168
          %1149 = vst.msk [vmem:[%s354] sm:$0xff] %vm1148, 0.0
        $region56: #{tpu_custom_call.1} parent=47 // pred_fallthru
          _
        %v1150 = vld [vmem:[%s354] sm:$0xff]
        %v1151 = vadd.f32 %v1136, %v1138
        %1152 = vadd.xlane.f32.xlu0 %v1151
        %v1153 = vpop.xlane.xlu0 %1152
        %v1154 = vadd.f32 %v1150, %v1153
        %vm1155 = vcmask 7168
        %1156 = vst.msk [vmem:[%s354] sm:$0xff] %vm1155, %v1154
        %s1157 = sand.u32 %s202, 1
        %s1158 = scalar_lea.sflag [#allocation4], %s1157
        %s1159 = sand.u32 %s202, 1
        %s1160 = smul.addr %s1159, 16
        %s1161 = scalar_lea.vmem [#allocation5], %s1160
        %p1162 = scmp.lt.s32.totalorder %s30, 1
        %s1163 = scalar_select %p1162, %s30, 1
        %s1164 = smul.addr %s1163, 8
        %s1165 = scalar_lea.vmem %s8, %s1164
        // Predicated region
        $region57: #{tpu_custom_call.1} parent=47 // pred_check
          %p1166 = pneg %p212
        $region58: #{tpu_custom_call.1} parent=47 // pred_check_branch
          %1168 = sbr.rel (%p1166) target = $region60
        $region59: #{tpu_custom_call.1} parent=47 // pred_region
          %s1169 = smul.u32 2, %s31
          %s1171 = ssub.s32 256, 256
          %1172 = vsyncadd %s1158, %s1171
          %s1173 = smul.addr %s30, 8
          %s1174 = sadd.s32 %s1169, %s1173
          %s1175 = smul.addr %s1174, 128
          %s1176 = scalar_lea.hbm %s7, %s1175
          %s1178 = sshll.u32 %s1161, 4
          %s1179 = int_to_ptr.vmem [resolvable:$true] %s1178
          %1181 = dma.vmem_to_hbm [thread:$0]  %s1179, 256, %s1176, %s1158
        $region60: #{tpu_custom_call.1} parent=47 // pred_fallthru
          _
        // Predicated region
        $region61: #{tpu_custom_call.1} parent=47 // pred_check
          %p1182 = pneg %p238
        $region62: #{tpu_custom_call.1} parent=47 // pred_check_branch
          %1184 = sbr.rel (%p1182) target = $region64
        $region63: #{tpu_custom_call.1} parent=47 // pred_region
          _
        $region64: #{tpu_custom_call.1} parent=47 // pred_fallthru
          _
      $region48: #{tpu_custom_call.1} parent=5 // pred_fallthru
        _
      %p1185 = scmp.le.s32.totalorder 2, %s21
      // Predicated region
      $region65: #{tpu_custom_call.1} parent=5 // pred_check
        %p1186 = pneg %p1185
      $region66: #{tpu_custom_call.1} parent=5 // pred_check_branch
        %1188 = sbr.rel (%p1186) target = $region68
      $region67: #{tpu_custom_call.1} parent=5 // pred_region
        %s1189 = ssub.s32 %s21, 2
        // Predicated region
        $region69: #{tpu_custom_call.1} parent=67 // pred_check
          %p1190 = pneg %p218
        $region70: #{tpu_custom_call.1} parent=67 // pred_check_branch
          %1192 = sbr.rel (%p1190) target = $region72
        $region71: #{tpu_custom_call.1} parent=67 // pred_region
          %s1193 = sand.u32 %s203, 1
          %s1194 = scalar_lea.sflag [#allocation4], %s1193
          %s1195 = sand.u32 %s203, 1
          %s1196 = smul.addr %s1195, 16
          %s1197 = scalar_lea.vmem [#allocation5], %s1196
          %1198 = dma.done %s1194, 256
        $region72: #{tpu_custom_call.1} parent=67 // pred_fallthru
          _
        // Predicated region
        $region73: #{tpu_custom_call.1} parent=67 // pred_check
          %p1199 = pneg %p244
        $region74: #{tpu_custom_call.1} parent=67 // pred_check_branch
          %1201 = sbr.rel (%p1199) target = $region76
        $region75: #{tpu_custom_call.1} parent=67 // pred_region
          %p1202 = scmp.lt.s32.totalorder %s32, 1
          %s1203 = scalar_select %p1202, %s32, 1
          %s1204 = smul.addr %s1203, 8
          %s1205 = scalar_lea.vmem %s8, %s1204
        $region76: #{tpu_custom_call.1} parent=67 // pred_fallthru
          _
      $region68: #{tpu_custom_call.1} parent=5 // pred_fallthru
        _
    $region6: #{tpu_custom_call.1} parent=1 // loop_footer
      %s25 = sadd.s32 1, %s21
    $region7: #{tpu_custom_call.1} parent=1 // loop_footer_branch
      %20 = sbr.rel target = $region3
    $region8: #{tpu_custom_call.1} parent=1 // loop_exit
      _
    %1206 = vsyncpa [#allocation3], 1
    %s1207 = scalar_lea.sflag [#allocation3], 1
    %1208 = vsyncpa %s1207, 1
    %1209 = vsyncpa [#allocation4], 1
    %s1210 = scalar_lea.sflag [#allocation4], 1
    %1211 = vsyncpa %s1210, 1

</llo_original>
